<compile_context>
chip_gen: v6e
topology: v6e:2x2x1
jax: 0.10.0
libtpu: 0.0.40
codegen_flags: <defaults>
</compile_context>

<pallas_src>
import numpy as np
import jax
import jax.numpy as jnp
from jax.experimental import pallas as pl
from jax.experimental.pallas import tpu as pltpu


# ----------------------------------------------------------------------------
# Fused kernel: q_sample + 1x1-conv stand-in model + losses + x0 + brightness.
# Grid = (B, num_spatial_tiles); B is "parallel" (v7x 2-TC sharding), the
# spatial axis is "arbitrary" (light accumulator is revisited across it).
# ----------------------------------------------------------------------------
def _fused_diffusion_kernel(ca_ref, cb_ref,                       # SMEM (scalar prefetch)
                            gt_ref, nz_ref, low_ref, cat_ref,     # (1, C, TS) VMEM tiles
                            wT_ref, bias_ref,                     # (3, C, C), (C, 1) VMEM
                            mse_ref, y0_ref, light_ref):          # outputs
    b = pl.program_id(0)
    s = pl.program_id(1)

    ca = ca_ref[b]                       # sqrt_alphas_bar[t[b]]
    cb = cb_ref[b]                       # sqrt_one_minus_alphas_bar[t[b]]
    inv_ca = 1.0 / ca                    # hoisted scalar reciprocal

    gt = gt_ref[0]                       # (C, TS)
    nz = nz_ref[0]
    low = low_ref[0]
    cat = cat_ref[0]

    # forward diffusion (q_sample); kept in VMEM only, never written to HBM
    yt = ca * gt + cb * nz               # (C, TS)

    # per-image brightness: accumulate raw sum of gt across spatial tiles into
    # a tiny (1,1,128) output; the wrapper divides by C*H*W and clips.
    @pl.when(s == 0)
    def _():
        light_ref[...] = jnp.zeros_like(light_ref)

    light_ref[...] += jnp.sum(gt)

    # Stand-in denoiser: 1x1 conv (Cin = 3C -> Cout = C).  The channel mix is
    # done on the MXU as three tiny (C,C)@(C,TS) matmuls (pre-transposed
    # weights live in VMEM), leaving the VPU free for the elementwise work.
    # TODO(synk): the real `self.model` is an external conditional UNet taking
    # (input, t, light_high[, context_zero=True w.p. 2%]); not reproducible here.
    pred = (jnp.dot(wT_ref[0], low, preferred_element_type=jnp.float32)
            + jnp.dot(wT_ref[1], cat, preferred_element_type=jnp.float32)
            + jnp.dot(wT_ref[2], yt, preferred_element_type=jnp.float32)
            + bias_ref[...])                                 # (C, TS) + (C, 1)

    diff = pred - nz
    mse_ref[0] = diff * diff                             # per-pixel MSE
    y0_ref[0] = inv_ca * (yt - cb * pred)                # x0 reconstruction


# ----------------------------------------------------------------------------
# Schedule setup (plain JAX / NumPy glue).
# ----------------------------------------------------------------------------
def make_schedule(beta_1, beta_T, T):
    # torch.linspace(...).double() -> cumprod -> sqrt; extract() casts the
    # gathered coefficients to float32, so float32 buffers match semantics.
    betas = np.linspace(beta_1, beta_T, T, dtype=np.float64)
    alphas = 1.0 - betas
    alphas_bar = np.cumprod(alphas, axis=0)
    sqrt_alphas_bar = np.sqrt(alphas_bar).astype(np.float32)
    sqrt_one_minus_alphas_bar = np.sqrt(1.0 - alphas_bar).astype(np.float32)
    return jnp.asarray(sqrt_alphas_bar), jnp.asarray(sqrt_one_minus_alphas_bar)


def _pick_spatial_tile(hw, max_tile=8192):
    """Largest multiple-of-128 divisor of hw that is <= max_tile.

    Falls back to the full row when hw is small (single tile keeps last block
    dim == full dim, which is always legal) or not 128-aligned.
    """
    if hw <= max_tile or hw % 128 != 0:
        return hw
    best = 128
    cand = 256
    while cand <= max_tile:
        if hw % cand == 0:
            best = cand
        cand += 128
    return best


def diffusion_trainer_forward(gt_images, lowlight_image, data_concate, epoch,
                              key, sqrt_ab, sqrt_1mab, model_w, model_b):
    B, C, H, W = gt_images.shape
    T = sqrt_ab.shape[0]
    HW = H * W

    # t ~ randint(T), noise ~ N(0,1)  (torch.randint / torch.randn_like)
    k1, k2 = jax.random.split(key)
    t = jax.random.randint(k1, (B,), 0, T, dtype=jnp.int32)
    noise = jax.random.normal(k2, gt_images.shape, dtype=jnp.float32)

    ca = sqrt_ab[t]          # (B,) f32 -> scalar prefetch (SMEM)
    cb = sqrt_1mab[t]        # (B,) f32 -> scalar prefetch (SMEM)

    TS = _pick_spatial_tile(HW)
    assert HW % TS == 0
    NS = HW // TS

    # free reshapes: NCHW -> (B, C, H*W) so H*W sits on the lane axis
    gt3 = gt_images.astype(jnp.float32).reshape(B, C, HW)
    nz3 = noise.reshape(B, C, HW)
    low3 = lowlight_image.astype(jnp.float32).reshape(B, C, HW)
    cat3 = data_concate.astype(jnp.float32).reshape(B, C, HW)

    # pre-transposed 1x1-conv weights: (3C, C) -> (3, C, C) with each slice W_k^T
    wT3 = model_w.astype(jnp.float32).reshape(3, C, C).transpose(0, 2, 1)
    bias_col = model_b.astype(jnp.float32).reshape(C, 1)

    data_spec = pl.BlockSpec((1, C, TS), lambda b, s, *_: (b, 0, s))
    w_spec = pl.BlockSpec((3, C, C), lambda b, s, *_: (0, 0, 0))      # resident
    bias_spec = pl.BlockSpec((C, 1), lambda b, s, *_: (0, 0))         # resident
    light_spec = pl.BlockSpec((1, 1, 128), lambda b, s, *_: (b, 0, 0))

    mse3, y03, light_sum = pl.pallas_call(
        _fused_diffusion_kernel,
        out_shape=(jax.ShapeDtypeStruct((B, C, HW), jnp.float32),
                   jax.ShapeDtypeStruct((B, C, HW), jnp.float32),
                   jax.ShapeDtypeStruct((B, 1, 128), jnp.float32)),
        grid_spec=pltpu.PrefetchScalarGridSpec(
            num_scalar_prefetch=2,                 # ca, cb
            grid=(B, NS),
            in_specs=[data_spec, data_spec, data_spec, data_spec,
                      w_spec, bias_spec],
            out_specs=[data_spec, data_spec, light_spec]),
        compiler_params=pltpu.CompilerParams(
            dimension_semantics=("parallel", "arbitrary")),
    )(ca, cb, gt3, nz3, low3, cat3, wT3, bias_col)

    mse_loss = mse3.reshape(B, C, H, W)
    y_0_pred = y03.reshape(B, C, H, W)
    # finalize brightness: mean over (C,H,W) + clip; tiny (B,)-sized op.
    # TODO(synk): `brighness_leve_high is not None` override not modeled.
    light_high = jnp.clip(light_sum[:, 0, 0] * (1.0 / (C * HW)), -10.0, 10.0)

    # Auxiliary losses: weights are 0 when epoch < second_start (= 20).
    # TODO(synk): Myloss.color_loss / light_loss, ssim_loss and LPIPS
    # perceptual loss are external modules with no in-script definition;
    # modeled as zero contributions.
    second_start = 20
    col_loss_weight = 0.0 if epoch < second_start else 100.0
    exposure_loss_weight = 0.0 if epoch < second_start else 20.0
    col_loss = jnp.float32(0.0) * col_loss_weight
    exposure_loss = jnp.float32(0.0) * exposure_loss_weight
    ssim_l = jnp.float32(0.0)
    perceptual_loss = jnp.float32(0.0)

    extra = col_loss + exposure_loss + ssim_l + perceptual_loss
    loss = mse_loss + extra
    return ([loss, mse_loss, col_loss, exposure_loss, ssim_l, perceptual_loss],
            y_0_pred, light_high)


if __name__ == "__main__":
    B, C, H, W = 2, 4, 16, 16
    T = 100
    beta_1, beta_T = 1e-4, 2e-2
    epoch = 5

    key = jax.random.PRNGKey(0)
    k_gt, k_low, k_cat, k_w, k_fwd = jax.random.split(key, 5)

    gt_images = jax.random.uniform(k_gt, (B, C, H, W), dtype=jnp.float32)
    lowlight_image = jax.random.uniform(k_low, (B, C, H, W), dtype=jnp.float32)
    data_concate = jax.random.uniform(k_cat, (B, C, H, W), dtype=jnp.float32)

    sqrt_ab, sqrt_1mab = make_schedule(beta_1, beta_T, T)

    # deterministic stand-in "model" parameters (1x1 conv: 3C -> C)
    model_w = (0.05 * jax.random.normal(k_w, (3 * C, C))).astype(jnp.float32)
    model_b = jnp.zeros((C,), dtype=jnp.float32)

    outs, y_0_pred, light_high = diffusion_trainer_forward(
        gt_images, lowlight_image, data_concate, epoch,
        k_fwd, sqrt_ab, sqrt_1mab, model_w, model_b)

    jax.block_until_ready(outs[0])
    jax.block_until_ready(y_0_pred)
    jax.block_until_ready(light_high)

    # ---- reference check (recompute t / noise from the same key split) ------
    k1, k2 = jax.random.split(k_fwd)
    t_ref = jax.random.randint(k1, (B,), 0, T, dtype=jnp.int32)
    noise_ref = jax.random.normal(k2, gt_images.shape, dtype=jnp.float32)

    gt_np = np.asarray(gt_images, dtype=np.float64)
    low_np = np.asarray(lowlight_image, dtype=np.float64)
    cat_np = np.asarray(data_concate, dtype=np.float64)
    nz_np = np.asarray(noise_ref, dtype=np.float64)
    ca_np = np.asarray(sqrt_ab, dtype=np.float64)[np.asarray(t_ref)][:, None, None, None]
    cb_np = np.asarray(sqrt_1mab, dtype=np.float64)[np.asarray(t_ref)][:, None, None, None]
    w_np = np.asarray(model_w, dtype=np.float64)
    b_np = np.asarray(model_b, dtype=np.float64)

    yt_np = ca_np * gt_np + cb_np * nz_np
    x_np = np.concatenate([low_np, cat_np, yt_np], axis=1)
    pred_np = np.einsum('bchw,cd->bdhw', x_np, w_np) + b_np[None, :, None, None]
    mse_np = (pred_np - nz_np) ** 2
    y0_np = (yt_np - cb_np * pred_np) / ca_np
    light_np = np.clip(gt_np.mean(axis=(1, 2, 3)), -10.0, 10.0)

    # Tolerances cover the MXU's f32 multi-pass matmul in the stand-in model.
    np.testing.assert_allclose(np.asarray(outs[1]), mse_np, rtol=2e-3, atol=2e-3)
    np.testing.assert_allclose(np.asarray(y_0_pred), y0_np, rtol=2e-3, atol=2e-3)
    np.testing.assert_allclose(np.asarray(light_high), light_np, rtol=1e-4, atol=1e-5)

    assert outs[0].shape == (B, C, H, W)
    assert outs[1].shape == (B, C, H, W)
    assert y_0_pred.shape == (B, C, H, W)
    assert light_high.shape == (B,)
    assert bool(jnp.all(jnp.isfinite(outs[0])))

    print("KERNEL_OK")
</pallas_src>

<mosaic_0001>
module attributes {stable_mosaic.version = 11 : i64} {
  func.func @_fused_diffusion_kernel(%arg0: i32, %arg1: i32, %arg2: memref<2xf32, #tpu.memory_space<smem>>, %arg3: memref<2xf32, #tpu.memory_space<smem>>, %arg4: memref<1x4x256xf32, #tpu.memory_space<vmem>>, %arg5: memref<1x4x256xf32, #tpu.memory_space<vmem>>, %arg6: memref<1x4x256xf32, #tpu.memory_space<vmem>>, %arg7: memref<1x4x256xf32, #tpu.memory_space<vmem>>, %arg8: memref<3x4x4xf32, #tpu.memory_space<vmem>>, %arg9: memref<4x1xf32, #tpu.memory_space<vmem>>, %arg10: memref<1x4x256xf32, #tpu.memory_space<vmem>>, %arg11: memref<1x4x256xf32, #tpu.memory_space<vmem>>, %arg12: memref<1x1x128xf32, #tpu.memory_space<vmem>>) attributes {dimension_semantics = [#tpu.dimension_semantics<parallel>, #tpu.dimension_semantics<arbitrary>], iteration_bounds = array<i64: 2, 1>, scalar_prefetch = 2 : i64, scratch_operands = 0 : i64, tpu.core_type = #tpu.core_type<tc>, window_params = [{transform_indices = @transform_0, window_bounds = array<i64: 1, 4, 256>}, {transform_indices = @transform_1, window_bounds = array<i64: 1, 4, 256>}, {transform_indices = @transform_2, window_bounds = array<i64: 1, 4, 256>}, {transform_indices = @transform_3, window_bounds = array<i64: 1, 4, 256>}, {pipeline_mode = #tpu.pipeline_mode<synchronous>, transform_indices = @transform_4, window_bounds = array<i64: 3, 4, 4>}, {pipeline_mode = #tpu.pipeline_mode<synchronous>, transform_indices = @transform_5, window_bounds = array<i64: 4, 1>}, {transform_indices = @transform_6, window_bounds = array<i64: 1, 4, 256>}, {transform_indices = @transform_7, window_bounds = array<i64: 1, 4, 256>}, {transform_indices = @transform_8, window_bounds = array<i64: 1, 1, 128>}]} {
    %0 = arith.index_cast %arg0 : i32 to index
    %1 = memref.load %arg2[%0] : memref<2xf32, #tpu.memory_space<smem>>
    %2 = arith.index_cast %arg0 : i32 to index
    %3 = memref.load %arg3[%2] : memref<2xf32, #tpu.memory_space<smem>>
    %cst = arith.constant 1.000000e+00 : f32
    %4 = arith.divf %cst, %1 : f32
    %c0 = arith.constant 0 : index
    %c0_0 = arith.constant 0 : index
    %c0_1 = arith.constant 0 : index
    %5 = vector.load %arg4[%c0, %c0_0, %c0_1] : memref<1x4x256xf32, #tpu.memory_space<vmem>>, vector<1x4x256xf32>
    %6 = vector.shape_cast %5 : vector<1x4x256xf32> to vector<4x256xf32>
    %c0_2 = arith.constant 0 : index
    %c0_3 = arith.constant 0 : index
    %c0_4 = arith.constant 0 : index
    %7 = vector.load %arg5[%c0_2, %c0_3, %c0_4] : memref<1x4x256xf32, #tpu.memory_space<vmem>>, vector<1x4x256xf32>
    %8 = vector.shape_cast %7 : vector<1x4x256xf32> to vector<4x256xf32>
    %c0_5 = arith.constant 0 : index
    %c0_6 = arith.constant 0 : index
    %c0_7 = arith.constant 0 : index
    %9 = vector.load %arg6[%c0_5, %c0_6, %c0_7] : memref<1x4x256xf32, #tpu.memory_space<vmem>>, vector<1x4x256xf32>
    %10 = vector.shape_cast %9 : vector<1x4x256xf32> to vector<4x256xf32>
    %c0_8 = arith.constant 0 : index
    %c0_9 = arith.constant 0 : index
    %c0_10 = arith.constant 0 : index
    %11 = vector.load %arg7[%c0_8, %c0_9, %c0_10] : memref<1x4x256xf32, #tpu.memory_space<vmem>>, vector<1x4x256xf32>
    %12 = vector.shape_cast %11 : vector<1x4x256xf32> to vector<4x256xf32>
    %13 = vector.broadcast %1 : f32 to vector<4x256xf32>
    %14 = arith.mulf %13, %6 : vector<4x256xf32>
    %15 = vector.broadcast %3 : f32 to vector<4x256xf32>
    %16 = arith.mulf %15, %8 : vector<4x256xf32>
    %17 = arith.addf %14, %16 : vector<4x256xf32>
    %c0_i32 = arith.constant 0 : i32
    %18 = arith.cmpi eq, %arg1, %c0_i32 : i32
    %19 = arith.extui %18 : i1 to i32
    %c0_i32_11 = arith.constant 0 : i32
    %20 = arith.cmpi ne, %19, %c0_i32_11 : i32
    scf.if %20 {
      %cst_37 = arith.constant 0.000000e+00 : f32
      %56 = vector.broadcast %cst_37 : f32 to vector<1x1x128xf32>
      %c0_38 = arith.constant 0 : index
      %c0_39 = arith.constant 0 : index
      %c0_40 = arith.constant 0 : index
      %57 = vector.load %arg12[%c0_38, %c0_39, %c0_40] : memref<1x1x128xf32, #tpu.memory_space<vmem>>, vector<1x1x128xf32>
      tpu.vector_store %arg12[%c0_38, %c0_39, %c0_40], %56 {strides = array<i32>} : memref<1x1x128xf32, #tpu.memory_space<vmem>>, vector<1x1x128xf32>,
    } else {
    }
    %c0_12 = arith.constant 0 : index
    %c0_13 = arith.constant 0 : index
    %c0_14 = arith.constant 0 : index
    %21 = vector.load %arg12[%c0_12, %c0_13, %c0_14] : memref<1x1x128xf32, #tpu.memory_space<vmem>>, vector<1x1x128xf32>
    %22 = vector.shape_cast %6 : vector<4x256xf32> to vector<1x4x256xf32>
    %cst_15 = arith.constant dense<0.000000e+00> : vector<1xf32>
    %23 = vector.multi_reduction <add>, %22, %cst_15 [1, 2] : vector<1x4x256xf32> to vector<1xf32>
    %24 = vector.shape_cast %23 : vector<1xf32> to vector<1x1x1xf32>
    %25 = vector.extract %24[0, 0, 0] : f32 from vector<1x1x1xf32>
    %26 = vector.broadcast %25 : f32 to vector<1x1x128xf32>
    %27 = arith.addf %21, %26 : vector<1x1x128xf32>
    %c0_16 = arith.constant 0 : index
    %c0_17 = arith.constant 0 : index
    %c0_18 = arith.constant 0 : index
    %28 = vector.load %arg12[%c0_16, %c0_17, %c0_18] : memref<1x1x128xf32, #tpu.memory_space<vmem>>, vector<1x1x128xf32>
    tpu.vector_store %arg12[%c0_16, %c0_17, %c0_18], %27 {strides = array<i32>} : memref<1x1x128xf32, #tpu.memory_space<vmem>>, vector<1x1x128xf32>,
    %c0_19 = arith.constant 0 : index
    %c0_20 = arith.constant 0 : index
    %c0_21 = arith.constant 0 : index
    %29 = vector.load %arg8[%c0_19, %c0_20, %c0_21] : memref<3x4x4xf32, #tpu.memory_space<vmem>>, vector<1x4x4xf32>
    %30 = vector.shape_cast %29 : vector<1x4x4xf32> to vector<4x4xf32>
    %cst_22 = arith.constant dense<0.000000e+00> : vector<4x256xf32>
    %31 = tpu.matmul %30, %10, %cst_22 {dimension_numbers = #tpu.dot_dimension_numbers<[1], [0], [0], [1], [0, 0, 1, 1], [], []>} : vector<4x4xf32>, vector<4x256xf32>, vector<4x256xf32> -> vector<4x256xf32>
    %c1 = arith.constant 1 : index
    %c0_23 = arith.constant 0 : index
    %c0_24 = arith.constant 0 : index
    %32 = vector.load %arg8[%c1, %c0_23, %c0_24] : memref<3x4x4xf32, #tpu.memory_space<vmem>>, vector<1x4x4xf32>
    %33 = vector.shape_cast %32 : vector<1x4x4xf32> to vector<4x4xf32>
    %cst_25 = arith.constant dense<0.000000e+00> : vector<4x256xf32>
    %34 = tpu.matmul %33, %12, %cst_25 {dimension_numbers = #tpu.dot_dimension_numbers<[1], [0], [0], [1], [0, 0, 1, 1], [], []>} : vector<4x4xf32>, vector<4x256xf32>, vector<4x256xf32> -> vector<4x256xf32>
    %35 = arith.addf %31, %34 : vector<4x256xf32>
    %c2 = arith.constant 2 : index
    %c0_26 = arith.constant 0 : index
    %c0_27 = arith.constant 0 : index
    %36 = vector.load %arg8[%c2, %c0_26, %c0_27] : memref<3x4x4xf32, #tpu.memory_space<vmem>>, vector<1x4x4xf32>
    %37 = vector.shape_cast %36 : vector<1x4x4xf32> to vector<4x4xf32>
    %cst_28 = arith.constant dense<0.000000e+00> : vector<4x256xf32>
    %38 = tpu.matmul %37, %17, %cst_28 {dimension_numbers = #tpu.dot_dimension_numbers<[1], [0], [0], [1], [0, 0, 1, 1], [], []>} : vector<4x4xf32>, vector<4x256xf32>, vector<4x256xf32> -> vector<4x256xf32>
    %39 = arith.addf %35, %38 : vector<4x256xf32>
    %c0_29 = arith.constant 0 : index
    %c0_30 = arith.constant 0 : index
    %40 = vector.load %arg9[%c0_29, %c0_30] : memref<4x1xf32, #tpu.memory_space<vmem>>, vector<4x1xf32>
    %41 = vector.broadcast %40 : vector<4x1xf32> to vector<4x256xf32>
    %42 = arith.addf %39, %41 : vector<4x256xf32>
    %43 = arith.subf %42, %8 : vector<4x256xf32>
    %44 = arith.mulf %43, %43 : vector<4x256xf32>
    %c0_31 = arith.constant 0 : index
    %c0_32 = arith.constant 0 : index
    %c0_33 = arith.constant 0 : index
    %45 = vector.load %arg10[%c0_31, %c0_32, %c0_33] : memref<1x4x256xf32, #tpu.memory_space<vmem>>, vector<1x4x256xf32>
    %46 = vector.shape_cast %45 : vector<1x4x256xf32> to vector<4x256xf32>
    %47 = vector.shape_cast %44 : vector<4x256xf32> to vector<1x4x256xf32>
    tpu.vector_store %arg10[%c0_31, %c0_32, %c0_33], %47 {strides = array<i32>} : memref<1x4x256xf32, #tpu.memory_space<vmem>>, vector<1x4x256xf32>,
    %48 = vector.broadcast %3 : f32 to vector<4x256xf32>
    %49 = arith.mulf %48, %42 : vector<4x256xf32>
    %50 = arith.subf %17, %49 : vector<4x256xf32>
    %51 = vector.broadcast %4 : f32 to vector<4x256xf32>
    %52 = arith.mulf %51, %50 : vector<4x256xf32>
    %c0_34 = arith.constant 0 : index
    %c0_35 = arith.constant 0 : index
    %c0_36 = arith.constant 0 : index
    %53 = vector.load %arg11[%c0_34, %c0_35, %c0_36] : memref<1x4x256xf32, #tpu.memory_space<vmem>>, vector<1x4x256xf32>
    %54 = vector.shape_cast %53 : vector<1x4x256xf32> to vector<4x256xf32>
    %55 = vector.shape_cast %52 : vector<4x256xf32> to vector<1x4x256xf32>
    tpu.vector_store %arg11[%c0_34, %c0_35, %c0_36], %55 {strides = array<i32>} : memref<1x4x256xf32, #tpu.memory_space<vmem>>, vector<1x4x256xf32>,
    return
  }
  func.func @transform_0(%arg0: i32, %arg1: i32, %arg2: memref<2xf32, #tpu.memory_space<smem>>, %arg3: memref<2xf32, #tpu.memory_space<smem>>) -> (i32, i32, i32) {
    %c0_i32 = arith.constant 0 : i32
    %c0_i32_0 = arith.constant 0 : i32
    return %arg0, %c0_i32, %arg1 : i32, i32, i32
  }
  func.func @transform_1(%arg0: i32, %arg1: i32, %arg2: memref<2xf32, #tpu.memory_space<smem>>, %arg3: memref<2xf32, #tpu.memory_space<smem>>) -> (i32, i32, i32) {
    %c0_i32 = arith.constant 0 : i32
    %c0_i32_0 = arith.constant 0 : i32
    return %arg0, %c0_i32, %arg1 : i32, i32, i32
  }
  func.func @transform_2(%arg0: i32, %arg1: i32, %arg2: memref<2xf32, #tpu.memory_space<smem>>, %arg3: memref<2xf32, #tpu.memory_space<smem>>) -> (i32, i32, i32) {
    %c0_i32 = arith.constant 0 : i32
    %c0_i32_0 = arith.constant 0 : i32
    return %arg0, %c0_i32, %arg1 : i32, i32, i32
  }
  func.func @transform_3(%arg0: i32, %arg1: i32, %arg2: memref<2xf32, #tpu.memory_space<smem>>, %arg3: memref<2xf32, #tpu.memory_space<smem>>) -> (i32, i32, i32) {
    %c0_i32 = arith.constant 0 : i32
    %c0_i32_0 = arith.constant 0 : i32
    return %arg0, %c0_i32, %arg1 : i32, i32, i32
  }
  func.func @transform_4(%arg0: i32, %arg1: i32, %arg2: memref<2xf32, #tpu.memory_space<smem>>, %arg3: memref<2xf32, #tpu.memory_space<smem>>) -> (i32, i32, i32) {
    %c0_i32 = arith.constant 0 : i32
    %c0_i32_0 = arith.constant 0 : i32
    %c0_i32_1 = arith.constant 0 : i32
    %c0_i32_2 = arith.constant 0 : i32
    return %c0_i32, %c0_i32_0, %c0_i32_1 : i32, i32, i32
  }
  func.func @transform_5(%arg0: i32, %arg1: i32, %arg2: memref<2xf32, #tpu.memory_space<smem>>, %arg3: memref<2xf32, #tpu.memory_space<smem>>) -> (i32, i32) {
    %c0_i32 = arith.constant 0 : i32
    %c0_i32_0 = arith.constant 0 : i32
    %c0_i32_1 = arith.constant 0 : i32
    return %c0_i32, %c0_i32_0 : i32, i32
  }
  func.func @transform_6(%arg0: i32, %arg1: i32, %arg2: memref<2xf32, #tpu.memory_space<smem>>, %arg3: memref<2xf32, #tpu.memory_space<smem>>) -> (i32, i32, i32) {
    %c0_i32 = arith.constant 0 : i32
    %c0_i32_0 = arith.constant 0 : i32
    return %arg0, %c0_i32, %arg1 : i32, i32, i32
  }
  func.func @transform_7(%arg0: i32, %arg1: i32, %arg2: memref<2xf32, #tpu.memory_space<smem>>, %arg3: memref<2xf32, #tpu.memory_space<smem>>) -> (i32, i32, i32) {
    %c0_i32 = arith.constant 0 : i32
    %c0_i32_0 = arith.constant 0 : i32
    return %arg0, %c0_i32, %arg1 : i32, i32, i32
  }
  func.func @transform_8(%arg0: i32, %arg1: i32, %arg2: memref<2xf32, #tpu.memory_space<smem>>, %arg3: memref<2xf32, #tpu.memory_space<smem>>) -> (i32, i32, i32) {
    %c0_i32 = arith.constant 0 : i32
    %c0_i32_0 = arith.constant 0 : i32
    %c0_i32_1 = arith.constant 0 : i32
    return %arg0, %c0_i32, %c0_i32_0 : i32, i32, i32
  }
}

</mosaic_0001>

<llo_original>
// kernel: tpu_custom_call.1
$region0: #{tpu_custom_call.1}
  #allocation0 [shape = 'u32[]', space=smem, size = 0x4, offset = 0x4, fixed_abs, tag = 'smem constant byte address 0x4 - core index']
  #allocation1 [shape = 'u32[144,128]{1,0:T(1,128)}', space=vmem, size = 0x12000, scoped, tag = 'internal scratch']
  #allocation2 [shape = 's32[1]{0}', space=sflag, size = 0x4, scoped, tag = 'scoped memory for tpu_custom_call.1']
  #allocation3 [shape = 'u8[512]{0}', space=smem, size = 0x200, scoped, tag = 'prefetched SMEM operand 0']
  #allocation4 [shape = 'u8[512]{0}', space=smem, size = 0x200, scoped, tag = 'prefetched SMEM operand 1']
  %s0 = inlined_call_operand.vmem [shape: f32[2], index: 0, kind: input, shape index: {}]
  %s1 = inlined_call_operand.vmem [shape: f32[2], index: 1, kind: input, shape index: {}]
  %s2 = inlined_call_operand.hbm [shape: f32[2,4,256], index: 2, kind: input, shape index: {}]
  %s3 = inlined_call_operand.hbm [shape: f32[2,4,256], index: 3, kind: input, shape index: {}]
  %s4 = inlined_call_operand.hbm [shape: f32[2,4,256], index: 4, kind: input, shape index: {}]
  %s5 = inlined_call_operand.hbm [shape: f32[2,4,256], index: 5, kind: input, shape index: {}]
  %s6 = inlined_call_operand.vmem [shape: f32[3,4,4], index: 6, kind: input, shape index: {}]
  %s7 = inlined_call_operand.vmem [shape: f32[4,1], index: 7, kind: input, shape index: {}]
  %s8 = inlined_call_operand.hbm [shape: f32[2,4,256], index: 8, kind: output, shape index: {0}]
  %s9 = inlined_call_operand.hbm [shape: f32[2,4,256], index: 9, kind: output, shape index: {1}]
  %s10 = inlined_call_operand.hbm [shape: f32[2,1,128], index: 10, kind: output, shape index: {2}]
  %11 = xla_tuple %s8, %s9, %s10
  %s12 = sld [smem:[#allocation0]]
  $region93: #{tpu_custom_call.1} parent=0
    _
  %s14 = ssub.s32 1, %s12
  %s15 = scalar_select 0, %s14, %s12
  %s16 = sshll.u32 %s0, 4
  %s17 = int_to_ptr.vmem [resolvable:$true] %s16
  %19 = dma.vmem_to_smem %s17, 16, [#allocation3], [#allocation2]
  %s20 = sshll.u32 %s1, 4
  %s21 = int_to_ptr.vmem [resolvable:$true] %s20
  %23 = dma.vmem_to_smem %s21, 16, [#allocation4], [#allocation2]
  %24 = dma.done [#allocation2], 32
  %25 = sfence
  $region1: #{tpu_custom_call.1} parent=0
    #allocation5 [shape = 'u8[8192]{0}', space=vmem, size = 0x2000, scoped, tag = 'input window, operand 2']
    #allocation6 [shape = 's32[2]{0}', space=sflag, size = 0x8, scoped, tag = 'scoped memory for tpu_custom_call.1']
    #allocation7 [shape = 's32[2]{0}', space=sflag, size = 0x8, scoped, tag = 'scoped memory for tpu_custom_call.1']
    #allocation8 [shape = 'u8[8192]{0}', space=vmem, size = 0x2000, scoped, tag = 'input window, operand 3']
    #allocation9 [shape = 's32[2]{0}', space=sflag, size = 0x8, scoped, tag = 'scoped memory for tpu_custom_call.1']
    #allocation10 [shape = 'u8[8192]{0}', space=vmem, size = 0x2000, scoped, tag = 'input window, operand 4']
    #allocation11 [shape = 'u8[8192]{0}', space=vmem, size = 0x2000, scoped, tag = 'input window, operand 5']
    #allocation12 [shape = 's32[2]{0}', space=sflag, size = 0x8, scoped, tag = 'scoped memory for tpu_custom_call.1']
    #allocation13 [shape = 'u8[8192]{0}', space=vmem, size = 0x2000, scoped, tag = 'output window, operand 0']
    #allocation14 [shape = 'u8[8192]{0}', space=vmem, size = 0x2000, scoped, tag = 'output window, operand 1']
    #allocation15 [shape = 's32[2]{0}', space=sflag, size = 0x8, scoped, tag = 'scoped memory for tpu_custom_call.1']
    #allocation16 [shape = 'u8[1024]{0}', space=vmem, size = 0x400, scoped, tag = 'output window, operand 2']
    %26 = vsyncpa [#allocation6], 0
    %s27 = scalar_lea.sflag [#allocation6], 1
    %28 = vsyncpa %s27, 0
    %29 = vsyncpa [#allocation9], 0
    %s30 = scalar_lea.sflag [#allocation9], 1
    %31 = vsyncpa %s30, 0
    %32 = vsyncpa [#allocation12], 0
    %s33 = scalar_lea.sflag [#allocation12], 1
    %34 = vsyncpa %s33, 0
    %35 = vsyncpa [#allocation7], 0
    %s36 = scalar_lea.sflag [#allocation7], 1
    %37 = vsyncpa %s36, 0
    %38 = vsyncpa [#allocation15], 0
    %s39 = scalar_lea.sflag [#allocation15], 1
    %40 = vsyncpa %s39, 0
    loop: start=0, step=1, limit=4
    $region2: #{tpu_custom_call.1} parent=1 // loop_pre_header
      _
    $region3: #{tpu_custom_call.1} parent=1 // loop_header
      %s42 = sphi 0, %s46
      %p43 = scmp.ge.s32.totalorder %s42, 4
      %s49 = sphi 0, %s61
      %s50 = sphi 0, %s57
      %s51 = sphi 0, %s49
      %s52 = sphi 0, %s50
      %s53 = sphi 0, %s51
      %s54 = sphi 0, %s52
      %s66 = sphi 0, %s68
      %s69 = sphi 0, %s66
      %s70 = sphi 0, %s69
      %s86 = sphi 0, %s70
      %s94 = sphi 0, %s96
      %s97 = sphi 0, %s94
      %s98 = sphi 0, %s97
      %s114 = sphi 0, %s98
      %s122 = sphi 0, %s124
      %s125 = sphi 0, %s122
      %s126 = sphi 0, %s125
      %s142 = sphi 0, %s126
      %s150 = sphi 0, %s152
      %s153 = sphi 0, %s150
      %s154 = sphi 0, %s153
      %s170 = sphi 0, %s154
      %s174 = sphi 0, %s174
      %s176 = sphi 0, %s174
      %s177 = sphi 0, %s176
      %s191 = sphi 0, %s177
      %s195 = sphi 0, %s195
      %s197 = sphi 0, %s195
      %s198 = sphi 0, %s197
      %s212 = sphi 0, %s198
      %s220 = sphi 0, %s222
      %s223 = sphi 0, %s220
      %s224 = sphi 0, %s223
      %s240 = sphi 0, %s224
      %s248 = sphi 0, %s250
      %s251 = sphi 0, %s248
      %s252 = sphi 0, %s251
      %s268 = sphi 0, %s252
      %s274 = sphi 0, %s276
      %s277 = sphi 0, %s274
      %s278 = sphi 0, %s277
      %s294 = sphi 0, %s278
    $region4: #{tpu_custom_call.1} parent=1 // loop_header_branch
      %45 = sbr.rel (%p43) target = $region8
    $region5: #{tpu_custom_call.1} parent=1 // loop_body
      %s47 = ssub.s32 %s42, 1
      %s48 = ssub.s32 %s42, 2
      %s55 = sadd.s32 1, %s50
      %p56 = scmp.ge.s32.totalorder %s55, 1
      %s57 = scalar_select %p56, 0, %s55
      %s58 = sadd.s32 1, %s49
      %s59 = scalar_select %p56, %s58, %s49
      %p60 = scmp.ge.s32.totalorder %s59, 2
      %s61 = scalar_select %p60, 0, %s59
      %s62 = ssub.s32 %s49, %s61
      %s63 = ssub.s32 %s50, %s57
      %s64 = sor.u32 %s62, %s63
      %p65 = scmp.eq.s32.totalorder %s64, 0
      %s67 = sadd.s32 %s66, 1
      %s68 = scalar_select %p65, %s66, %s67
      %p71 = pneg %p65
      %p72 = scmp.eq.s32.totalorder %s42, 1
      %p73 = por %p71, %p72
      %p74 = scmp.ne.s32.totalorder %s66, %s69
      %p75 = scmp.eq.s32.totalorder %s42, 0
      %p76 = por %p74, %p75
      %p77 = scmp.ne.s32.totalorder %s66, %s69
      %p78 = scmp.eq.s32.totalorder %s47, 1
      %p79 = por %p77, %p78
      %p80 = scmp.ne.s32.totalorder %s69, %s70
      %p81 = scmp.eq.s32.totalorder %s47, 0
      %p82 = por %p80, %p81
      %p83 = scmp.ne.s32.totalorder %s69, %s70
      %p84 = scmp.eq.s32.totalorder %s48, 1
      %p85 = por %p83, %p84
      %p87 = scmp.ne.s32.totalorder %s70, %s86
      %p88 = scmp.eq.s32.totalorder %s48, 0
      %p89 = por %p87, %p88
      %s90 = ssub.s32 %s49, %s61
      %s91 = ssub.s32 %s50, %s57
      %s92 = sor.u32 %s90, %s91
      %p93 = scmp.eq.s32.totalorder %s92, 0
      %s95 = sadd.s32 %s94, 1
      %s96 = scalar_select %p93, %s94, %s95
      %p99 = pneg %p93
      %p100 = scmp.eq.s32.totalorder %s42, 1
      %p101 = por %p99, %p100
      %p102 = scmp.ne.s32.totalorder %s94, %s97
      %p103 = scmp.eq.s32.totalorder %s42, 0
      %p104 = por %p102, %p103
      %p105 = scmp.ne.s32.totalorder %s94, %s97
      %p106 = scmp.eq.s32.totalorder %s47, 1
      %p107 = por %p105, %p106
      %p108 = scmp.ne.s32.totalorder %s97, %s98
      %p109 = scmp.eq.s32.totalorder %s47, 0
      %p110 = por %p108, %p109
      %p111 = scmp.ne.s32.totalorder %s97, %s98
      %p112 = scmp.eq.s32.totalorder %s48, 1
      %p113 = por %p111, %p112
      %p115 = scmp.ne.s32.totalorder %s98, %s114
      %p116 = scmp.eq.s32.totalorder %s48, 0
      %p117 = por %p115, %p116
      %s118 = ssub.s32 %s49, %s61
      %s119 = ssub.s32 %s50, %s57
      %s120 = sor.u32 %s118, %s119
      %p121 = scmp.eq.s32.totalorder %s120, 0
      %s123 = sadd.s32 %s122, 1
      %s124 = scalar_select %p121, %s122, %s123
      %p127 = pneg %p121
      %p128 = scmp.eq.s32.totalorder %s42, 1
      %p129 = por %p127, %p128
      %p130 = scmp.ne.s32.totalorder %s122, %s125
      %p131 = scmp.eq.s32.totalorder %s42, 0
      %p132 = por %p130, %p131
      %p133 = scmp.ne.s32.totalorder %s122, %s125
      %p134 = scmp.eq.s32.totalorder %s47, 1
      %p135 = por %p133, %p134
      %p136 = scmp.ne.s32.totalorder %s125, %s126
      %p137 = scmp.eq.s32.totalorder %s47, 0
      %p138 = por %p136, %p137
      %p139 = scmp.ne.s32.totalorder %s125, %s126
      %p140 = scmp.eq.s32.totalorder %s48, 1
      %p141 = por %p139, %p140
      %p143 = scmp.ne.s32.totalorder %s126, %s142
      %p144 = scmp.eq.s32.totalorder %s48, 0
      %p145 = por %p143, %p144
      %s146 = ssub.s32 %s49, %s61
      %s147 = ssub.s32 %s50, %s57
      %s148 = sor.u32 %s146, %s147
      %p149 = scmp.eq.s32.totalorder %s148, 0
      %s151 = sadd.s32 %s150, 1
      %s152 = scalar_select %p149, %s150, %s151
      %p155 = pneg %p149
      %p156 = scmp.eq.s32.totalorder %s42, 1
      %p157 = por %p155, %p156
      %p158 = scmp.ne.s32.totalorder %s150, %s153
      %p159 = scmp.eq.s32.totalorder %s42, 0
      %p160 = por %p158, %p159
      %p161 = scmp.ne.s32.totalorder %s150, %s153
      %p162 = scmp.eq.s32.totalorder %s47, 1
      %p163 = por %p161, %p162
      %p164 = scmp.ne.s32.totalorder %s153, %s154
      %p165 = scmp.eq.s32.totalorder %s47, 0
      %p166 = por %p164, %p165
      %p167 = scmp.ne.s32.totalorder %s153, %s154
      %p168 = scmp.eq.s32.totalorder %s48, 1
      %p169 = por %p167, %p168
      %p171 = scmp.ne.s32.totalorder %s154, %s170
      %p172 = scmp.eq.s32.totalorder %s48, 0
      %p173 = por %p171, %p172
      %s175 = sadd.s32 %s174, 1
      %p178 = scmp.eq.s32.totalorder %s42, 1
      %p179 = scmp.ne.s32.totalorder %s174, %s176
      %p180 = scmp.eq.s32.totalorder %s42, 0
      %p181 = por %p179, %p180
      %p182 = scmp.ne.s32.totalorder %s174, %s176
      %p183 = scmp.eq.s32.totalorder %s47, 1
      %p184 = por %p182, %p183
      %p185 = scmp.ne.s32.totalorder %s176, %s177
      %p186 = scmp.eq.s32.totalorder %s47, 0
      %p187 = por %p185, %p186
      %p188 = scmp.ne.s32.totalorder %s176, %s177
      %p189 = scmp.eq.s32.totalorder %s48, 1
      %p190 = por %p188, %p189
      %p192 = scmp.ne.s32.totalorder %s177, %s191
      %p193 = scmp.eq.s32.totalorder %s48, 0
      %p194 = por %p192, %p193
      %s196 = sadd.s32 %s195, 1
      %p199 = scmp.eq.s32.totalorder %s42, 1
      %p200 = scmp.ne.s32.totalorder %s195, %s197
      %p201 = scmp.eq.s32.totalorder %s42, 0
      %p202 = por %p200, %p201
      %p203 = scmp.ne.s32.totalorder %s195, %s197
      %p204 = scmp.eq.s32.totalorder %s47, 1
      %p205 = por %p203, %p204
      %p206 = scmp.ne.s32.totalorder %s197, %s198
      %p207 = scmp.eq.s32.totalorder %s47, 0
      %p208 = por %p206, %p207
      %p209 = scmp.ne.s32.totalorder %s197, %s198
      %p210 = scmp.eq.s32.totalorder %s48, 1
      %p211 = por %p209, %p210
      %p213 = scmp.ne.s32.totalorder %s198, %s212
      %p214 = scmp.eq.s32.totalorder %s48, 0
      %p215 = por %p213, %p214
      %s216 = ssub.s32 %s49, %s61
      %s217 = ssub.s32 %s50, %s57
      %s218 = sor.u32 %s216, %s217
      %p219 = scmp.eq.s32.totalorder %s218, 0
      %s221 = sadd.s32 %s220, 1
      %s222 = scalar_select %p219, %s220, %s221
      %p225 = pneg %p219
      %p226 = scmp.eq.s32.totalorder %s42, 1
      %p227 = por %p225, %p226
      %p228 = scmp.ne.s32.totalorder %s220, %s223
      %p229 = scmp.eq.s32.totalorder %s42, 0
      %p230 = por %p228, %p229
      %p231 = scmp.ne.s32.totalorder %s220, %s223
      %p232 = scmp.eq.s32.totalorder %s47, 1
      %p233 = por %p231, %p232
      %p234 = scmp.ne.s32.totalorder %s223, %s224
      %p235 = scmp.eq.s32.totalorder %s47, 0
      %p236 = por %p234, %p235
      %p237 = scmp.ne.s32.totalorder %s223, %s224
      %p238 = scmp.eq.s32.totalorder %s48, 1
      %p239 = por %p237, %p238
      %p241 = scmp.ne.s32.totalorder %s224, %s240
      %p242 = scmp.eq.s32.totalorder %s48, 0
      %p243 = por %p241, %p242
      %s244 = ssub.s32 %s49, %s61
      %s245 = ssub.s32 %s50, %s57
      %s246 = sor.u32 %s244, %s245
      %p247 = scmp.eq.s32.totalorder %s246, 0
      %s249 = sadd.s32 %s248, 1
      %s250 = scalar_select %p247, %s248, %s249
      %p253 = pneg %p247
      %p254 = scmp.eq.s32.totalorder %s42, 1
      %p255 = por %p253, %p254
      %p256 = scmp.ne.s32.totalorder %s248, %s251
      %p257 = scmp.eq.s32.totalorder %s42, 0
      %p258 = por %p256, %p257
      %p259 = scmp.ne.s32.totalorder %s248, %s251
      %p260 = scmp.eq.s32.totalorder %s47, 1
      %p261 = por %p259, %p260
      %p262 = scmp.ne.s32.totalorder %s251, %s252
      %p263 = scmp.eq.s32.totalorder %s47, 0
      %p264 = por %p262, %p263
      %p265 = scmp.ne.s32.totalorder %s251, %s252
      %p266 = scmp.eq.s32.totalorder %s48, 1
      %p267 = por %p265, %p266
      %p269 = scmp.ne.s32.totalorder %s252, %s268
      %p270 = scmp.eq.s32.totalorder %s48, 0
      %p271 = por %p269, %p270
      %s272 = ssub.s32 %s49, %s61
      %p273 = scmp.eq.s32.totalorder %s272, 0
      %s275 = sadd.s32 %s274, 1
      %s276 = scalar_select %p273, %s274, %s275
      %p279 = pneg %p273
      %p280 = scmp.eq.s32.totalorder %s42, 1
      %p281 = por %p279, %p280
      %p282 = scmp.ne.s32.totalorder %s274, %s277
      %p283 = scmp.eq.s32.totalorder %s42, 0
      %p284 = por %p282, %p283
      %p285 = scmp.ne.s32.totalorder %s274, %s277
      %p286 = scmp.eq.s32.totalorder %s47, 1
      %p287 = por %p285, %p286
      %p288 = scmp.ne.s32.totalorder %s277, %s278
      %p289 = scmp.eq.s32.totalorder %s47, 0
      %p290 = por %p288, %p289
      %p291 = scmp.ne.s32.totalorder %s277, %s278
      %p292 = scmp.eq.s32.totalorder %s48, 1
      %p293 = por %p291, %p292
      %p295 = scmp.ne.s32.totalorder %s278, %s294
      %p296 = scmp.eq.s32.totalorder %s48, 0
      %p297 = por %p295, %p296
      %p298 = scmp.le.s32.totalorder 1, %s42
      %p299 = scmp.lt.s32.totalorder %s42, 3
      %p300 = pnand %p298, %p299
      %p301 = pneg %p300
      // Predicated region
      $region9: #{tpu_custom_call.1} parent=5 // pred_check
        _
      $region10: #{tpu_custom_call.1} parent=5 // pred_check_branch
        %303 = sbr.rel (%p300) target = $region12
      $region11: #{tpu_custom_call.1} parent=5 // pred_region
        %s304 = ssub.s32 %s42, 1
        // Predicated region
        $region13: #{tpu_custom_call.1} parent=11 // pred_check
          %p305 = pneg %p187
        $region14: #{tpu_custom_call.1} parent=11 // pred_check_branch
          %307 = sbr.rel (%p305) target = $region16
        $region15: #{tpu_custom_call.1} parent=11 // pred_region
          _
        $region16: #{tpu_custom_call.1} parent=11 // pred_fallthru
          _
        // Predicated region
        $region17: #{tpu_custom_call.1} parent=11 // pred_check
          %p308 = pneg %p208
        $region18: #{tpu_custom_call.1} parent=11 // pred_check_branch
          %310 = sbr.rel (%p308) target = $region20
        $region19: #{tpu_custom_call.1} parent=11 // pred_region
          _
        $region20: #{tpu_custom_call.1} parent=11 // pred_fallthru
          _
      $region12: #{tpu_custom_call.1} parent=5 // pred_fallthru
        _
      %p311 = scmp.lt.s32.totalorder %s42, 2
      // Predicated region
      $region21: #{tpu_custom_call.1} parent=5 // pred_check
        %p312 = pneg %p311
      $region22: #{tpu_custom_call.1} parent=5 // pred_check_branch
        %314 = sbr.rel (%p312) target = $region24
      $region23: #{tpu_custom_call.1} parent=5 // pred_region
        // Predicated region
        $region25: #{tpu_custom_call.1} parent=23 // pred_check
          %p315 = pneg %p76
        $region26: #{tpu_custom_call.1} parent=23 // pred_check_branch
          %317 = sbr.rel (%p315) target = $region28
        $region27: #{tpu_custom_call.1} parent=23 // pred_region
          %s318 = sand.u32 %s66, 1
          %s319 = scalar_lea.sflag [#allocation6], %s318
          %s320 = sand.u32 %s66, 1
          %s321 = smul.addr %s320, 8
          %s322 = scalar_lea.vmem [#allocation5], %s321
          %s323 = smul.u32 2, %s50
          %s325 = ssub.s32 128, 128
          %326 = vsyncadd %s319, %s325
          %s327 = smul.addr %s49, 2
          %s328 = sadd.s32 %s323, %s327
          %s329 = smul.addr %s328, 64
          %s330 = scalar_lea.hbm %s2, %s329
          %s332 = sshll.u32 %s322, 4
          %s333 = int_to_ptr.vmem [resolvable:$true] %s332
          %335 = dma.hbm_to_vmem [thread:$0]  %s330, 128, %s333, %s319
        $region28: #{tpu_custom_call.1} parent=23 // pred_fallthru
          _
        // Predicated region
        $region29: #{tpu_custom_call.1} parent=23 // pred_check
          %p336 = pneg %p104
        $region30: #{tpu_custom_call.1} parent=23 // pred_check_branch
          %338 = sbr.rel (%p336) target = $region32
        $region31: #{tpu_custom_call.1} parent=23 // pred_region
          %s339 = sand.u32 %s42, 1
          %s340 = scalar_lea.sflag [#allocation9], %s339
          %s341 = sand.u32 %s94, 1
          %s342 = smul.addr %s341, 8
          %s343 = scalar_lea.vmem [#allocation8], %s342
          %s344 = smul.u32 2, %s50
          %s346 = ssub.s32 128, 128
          %347 = vsyncadd %s340, %s346
          %s348 = smul.addr %s49, 2
          %s349 = sadd.s32 %s344, %s348
          %s350 = smul.addr %s349, 64
          %s351 = scalar_lea.hbm %s3, %s350
          %s353 = sshll.u32 %s343, 4
          %s354 = int_to_ptr.vmem [resolvable:$true] %s353
          %356 = dma.hbm_to_vmem [thread:$0]  %s351, 128, %s354, %s340
        $region32: #{tpu_custom_call.1} parent=23 // pred_fallthru
          _
        // Predicated region
        $region33: #{tpu_custom_call.1} parent=23 // pred_check
          %p357 = pneg %p132
        $region34: #{tpu_custom_call.1} parent=23 // pred_check_branch
          %359 = sbr.rel (%p357) target = $region36
        $region35: #{tpu_custom_call.1} parent=23 // pred_region
          %s360 = sand.u32 %s42, 1
          %s361 = scalar_lea.sflag [#allocation9], %s360
          %s362 = sand.u32 %s122, 1
          %s363 = smul.addr %s362, 8
          %s364 = scalar_lea.vmem [#allocation10], %s363
          %s365 = smul.u32 2, %s50
          %s367 = ssub.s32 128, 128
          %368 = vsyncadd %s361, %s367
          %s369 = smul.addr %s49, 2
          %s370 = sadd.s32 %s365, %s369
          %s371 = smul.addr %s370, 64
          %s372 = scalar_lea.hbm %s4, %s371
          %s374 = sshll.u32 %s364, 4
          %s375 = int_to_ptr.vmem [resolvable:$true] %s374
          %377 = dma.hbm_to_vmem [thread:$0]  %s372, 128, %s375, %s361
        $region36: #{tpu_custom_call.1} parent=23 // pred_fallthru
          _
        // Predicated region
        $region37: #{tpu_custom_call.1} parent=23 // pred_check
          %p378 = pneg %p160
        $region38: #{tpu_custom_call.1} parent=23 // pred_check_branch
          %380 = sbr.rel (%p378) target = $region40
        $region39: #{tpu_custom_call.1} parent=23 // pred_region
          %s381 = sand.u32 %s150, 1
          %s382 = scalar_lea.sflag [#allocation12], %s381
          %s383 = sand.u32 %s150, 1
          %s384 = smul.addr %s383, 8
          %s385 = scalar_lea.vmem [#allocation11], %s384
          %s386 = smul.u32 2, %s50
          %s388 = ssub.s32 128, 128
          %389 = vsyncadd %s382, %s388
          %s390 = smul.addr %s49, 2
          %s391 = sadd.s32 %s386, %s390
          %s392 = smul.addr %s391, 64
          %s393 = scalar_lea.hbm %s5, %s392
          %s395 = sshll.u32 %s385, 4
          %s396 = int_to_ptr.vmem [resolvable:$true] %s395
          %398 = dma.hbm_to_vmem [thread:$0]  %s393, 128, %s396, %s382
        $region40: #{tpu_custom_call.1} parent=23 // pred_fallthru
          _
      $region24: #{tpu_custom_call.1} parent=5 // pred_fallthru
        _
      %p399 = scmp.le.s32.totalorder 1, %s42
      %p400 = scmp.lt.s32.totalorder %s42, 3
      %p401 = pnand %p399, %p400
      %p402 = pneg %p401
      // Predicated region
      $region41: #{tpu_custom_call.1} parent=5 // pred_check
        _
      $region42: #{tpu_custom_call.1} parent=5 // pred_check_branch
        %404 = sbr.rel (%p401) target = $region44
      $region43: #{tpu_custom_call.1} parent=5 // pred_region
        %s405 = ssub.s32 %s42, 1
        %s406 = sand.u32 %s69, 1
        %s407 = scalar_lea.sflag [#allocation6], %s406
        %s408 = sand.u32 %s69, 1
        %s409 = smul.addr %s408, 8
        %s410 = scalar_lea.vmem [#allocation5], %s409
        // Predicated region
        $region45: #{tpu_custom_call.1} parent=43 // pred_check
          %p411 = pneg %p82
        $region46: #{tpu_custom_call.1} parent=43 // pred_check_branch
          %413 = sbr.rel (%p411) target = $region48
        $region47: #{tpu_custom_call.1} parent=43 // pred_region
          %414 = dma.done %s407, 128
        $region48: #{tpu_custom_call.1} parent=43 // pred_fallthru
          _
        %s415 = sand.u32 %s47, 1
        %s416 = scalar_lea.sflag [#allocation9], %s415
        %s417 = sand.u32 %s97, 1
        %s418 = smul.addr %s417, 8
        %s419 = scalar_lea.vmem [#allocation8], %s418
        // Predicated region
        $region49: #{tpu_custom_call.1} parent=43 // pred_check
          %p420 = pneg %p110
        $region50: #{tpu_custom_call.1} parent=43 // pred_check_branch
          %422 = sbr.rel (%p420) target = $region52
        $region51: #{tpu_custom_call.1} parent=43 // pred_region
          %423 = dma.done %s416, 128
        $region52: #{tpu_custom_call.1} parent=43 // pred_fallthru
          _
        %s424 = sand.u32 %s47, 1
        %s425 = scalar_lea.sflag [#allocation9], %s424
        %s426 = sand.u32 %s125, 1
        %s427 = smul.addr %s426, 8
        %s428 = scalar_lea.vmem [#allocation10], %s427
        // Predicated region
        $region53: #{tpu_custom_call.1} parent=43 // pred_check
          %p429 = pneg %p138
        $region54: #{tpu_custom_call.1} parent=43 // pred_check_branch
          %431 = sbr.rel (%p429) target = $region56
        $region55: #{tpu_custom_call.1} parent=43 // pred_region
          %432 = dma.done %s425, 128
        $region56: #{tpu_custom_call.1} parent=43 // pred_fallthru
          _
        %s433 = sand.u32 %s153, 1
        %s434 = scalar_lea.sflag [#allocation12], %s433
        %s435 = sand.u32 %s153, 1
        %s436 = smul.addr %s435, 8
        %s437 = scalar_lea.vmem [#allocation11], %s436
        // Predicated region
        $region57: #{tpu_custom_call.1} parent=43 // pred_check
          %p438 = pneg %p166
        $region58: #{tpu_custom_call.1} parent=43 // pred_check_branch
          %440 = sbr.rel (%p438) target = $region60
        $region59: #{tpu_custom_call.1} parent=43 // pred_region
          %441 = dma.done %s434, 128
        $region60: #{tpu_custom_call.1} parent=43 // pred_fallthru
          _
        %s442 = sand.u32 %s69, 1
        %s443 = scalar_lea.sflag [#allocation6], %s442
        %s444 = sand.u32 %s69, 1
        %s445 = smul.addr %s444, 8
        %s446 = scalar_lea.vmem [#allocation5], %s445
        %p447 = pneg %p82
        %p448 = pneg %p79
        %s449 = sand.u32 %s47, 1
        %s450 = scalar_lea.sflag [#allocation9], %s449
        %s451 = sand.u32 %s97, 1
        %s452 = smul.addr %s451, 8
        %s453 = scalar_lea.vmem [#allocation8], %s452
        %p454 = pneg %p110
        %p455 = pneg %p107
        %s456 = sand.u32 %s47, 1
        %s457 = scalar_lea.sflag [#allocation9], %s456
        %s458 = sand.u32 %s125, 1
        %s459 = smul.addr %s458, 8
        %s460 = scalar_lea.vmem [#allocation10], %s459
        %p461 = pneg %p138
        %p462 = pneg %p135
        %s463 = sand.u32 %s153, 1
        %s464 = scalar_lea.sflag [#allocation12], %s463
        %s465 = sand.u32 %s153, 1
        %s466 = smul.addr %s465, 8
        %s467 = scalar_lea.vmem [#allocation11], %s466
        %p468 = pneg %p166
        %p469 = pneg %p163
        %p470 = pneg %p187
        %p471 = pneg %p184
        %p472 = pneg %p208
        %p473 = pneg %p205
        %p474 = pneg %p236
        %p475 = pneg %p233
        %s476 = sand.u32 %s223, 1
        %s477 = scalar_lea.sflag [#allocation7], %s476
        %s478 = sand.u32 %s223, 1
        %s479 = smul.addr %s478, 8
        %s480 = scalar_lea.vmem [#allocation13], %s479
        %p481 = pneg %p264
        %p482 = pneg %p261
        %s483 = sand.u32 %s47, 1
        %s484 = scalar_lea.sflag [#allocation15], %s483
        %s485 = sand.u32 %s251, 1
        %s486 = smul.addr %s485, 8
        %s487 = scalar_lea.vmem [#allocation14], %s486
        %p488 = pneg %p290
        %p489 = pneg %p287
        %s490 = sand.u32 %s47, 1
        %s491 = scalar_lea.sflag [#allocation15], %s490
        %s492 = sand.u32 %s277, 1
        %s493 = scalar_lea.vmem [#allocation16], %s492
        %s494 = smul.u32 2, %s52
        %s495 = smul.u32 2, %s52
        %s496 = smul.u32 2, %s52
        %s497 = smul.u32 2, %s52
        %s498 = smul.u32 2, %s52
        %s499 = smul.u32 2, %s52
        %s500 = sld [smem:[#allocation3 + %s51]]
        %s501 = sld [smem:[#allocation4 + %s51]]
        %v502 = vstv %s500
        %v503 = vrcp.pop %v502
        %s504 = vtos %v503
        %v505 = vld [vmem:[%s410] sm:$0xff]
        %v506 = vld [vmem:[%s419] sm:$0xff]
        %v507 = vld [vmem:[%s428] sm:$0xff]
        %v508 = vld [vmem:[%s437] sm:$0xff]
        %v509 = vstv %s500
        %v510 = vmul.f32 %v509, %v505
        %v511 = vstv %s501
        %v512 = vmul.f32 %v511, %v506
        %v513 = vadd.f32 %v510, %v512
        %p514 = scmp.eq.s32.totalorder %s52, 0
        // Predicated region
        $region61: #{tpu_custom_call.1} parent=43 // pred_check
          %p515 = pneg %p514
        $region62: #{tpu_custom_call.1} parent=43 // pred_check_branch
          %517 = sbr.rel (%p515) target = $region64
        $region63: #{tpu_custom_call.1} parent=43 // pred_region
          %518 = vst [vmem:[%s493] sm:$0x1] 0.0
        $region64: #{tpu_custom_call.1} parent=43 // pred_fallthru
          _
        %v519 = vld [vmem:[%s493] sm:$0x1]
        %v521 = vcombine.high %v505, %v505
        %vm523 = vcmask 1043456
        %v524 = vsel %vm523, %v505, 0.0
        %v525 = vsel %vm523, %v521, 0.0
        %v526 = vadd.f32 %v524, %v525
        %527 = vadd.xlane.f32.xlu0 %v526
        %v528 = vpop.xlane.xlu0 %527
        %v529 = vrot.slane %v528, 4
        %v530 = vadd.f32 %v528, %v529
        %v531 = vrot.slane %v530, 2
        %v532 = vadd.f32 %v530, %v531
        %v533 = vrot.slane %v532, 1
        %v534 = vadd.f32 %v532, %v533
        %s535 = vtos %v534
        %v536 = vstv %s535
        %v537 = vadd.f32 %v519, %v536
        %538 = vst [vmem:[%s493] sm:$0x1] %v537
        %v539 = vld [vmem:[%s6] sm:$0xf]
        %s540 = scalar_lea.vmem %s6, 4
        %v541 = vld [vmem:[%s540] sm:$0xf]
        %v543 = vcombine.high %v508, %v508
        %vm544 = vcmask 31744
        %v546 = vsel %vm544, %v541, 0
        %v548 = vsel %vm523, %v508, 0
        %v550 = vsel %vm523, %v543, 0
        %552 = vmatprep.subr.mxu0 0.0
        %553 = vmatpush1.msra.mxu0 0.0
        %554 = vmatprep.subr.mxu0 0.0
        %555 = vmatpush1.msra.mxu0 0.0
        %556 = vmatprep.subr.mxu0 0.0
        %557 = vmatpush1.msra.mxu0 0.0
        %558 = vmatprep.subr.mxu0 0.0
        %559 = vmatpush1.msra.mxu0 0.0
        %560 = vmatprep.subr.mxu0 0.0
        %561 = vmatpush1.msra.mxu0 0.0
        %562 = vmatprep.subr.mxu0 0.0
        %563 = vmatpush1.msra.mxu0 0.0
        %564 = vmatprep.subr.mxu0 0.0
        %565 = vmatpush1.msra.mxu0 0.0
        %566 = vmatprep.subr.mxu0 0.0
        %567 = vmatpush1.msra.mxu0 0.0
        %568 = vmatprep.subr.mxu0 0.0
        %569 = vmatpush1.msra.mxu0 0.0
        %570 = vmatprep.subr.mxu0 0.0
        %571 = vmatpush1.msra.mxu0 0.0
        %572 = vmatprep.subr.mxu0 0.0
        %573 = vmatpush1.msra.mxu0 0.0
        %574 = vmatprep.subr.mxu0 0.0
        %575 = vmatpush1.msra.mxu0 0.0
        %576 = vmatprep.subr.mxu0 0.0
        %577 = vmatpush1.msra.mxu0 0.0
        %578 = vmatprep.subr.mxu0 0.0
        %579 = vmatpush1.msra.mxu0 0.0
        %580 = vmatprep.subr.mxu0 0.0
        %581 = vmatpush1.msra.mxu0 0.0
        %582 = vmatprep.subr.mxu0 %v550
        %583 = vmatpush1.msra.mxu0 %v548
        %584 = vmatprep.subr.mxu0 0.0
        %585 = vmatpush2.msra.mxu0 0.0
        %586 = vmatprep.subr.mxu0 0.0
        %587 = vmatpush2.msra.mxu0 0.0
        %588 = vmatprep.subr.mxu0 0.0
        %589 = vmatpush2.msra.mxu0 0.0
        %590 = vmatprep.subr.mxu0 0.0
        %591 = vmatpush2.msra.mxu0 0.0
        %592 = vmatprep.subr.mxu0 0.0
        %593 = vmatpush2.msra.mxu0 0.0
        %594 = vmatprep.subr.mxu0 0.0
        %595 = vmatpush2.msra.mxu0 0.0
        %596 = vmatprep.subr.mxu0 0.0
        %597 = vmatpush2.msra.mxu0 0.0
        %598 = vmatprep.subr.mxu0 0.0
        %599 = vmatpush2.msra.mxu0 0.0
        %600 = vmatprep.subr.mxu0 0.0
        %601 = vmatpush2.msra.mxu0 0.0
        %602 = vmatprep.subr.mxu0 0.0
        %603 = vmatpush2.msra.mxu0 0.0
        %604 = vmatprep.subr.mxu0 0.0
        %605 = vmatpush2.msra.mxu0 0.0
        %606 = vmatprep.subr.mxu0 0.0
        %607 = vmatpush2.msra.mxu0 0.0
        %608 = vmatprep.subr.mxu0 0.0
        %609 = vmatpush2.msra.mxu0 0.0
        %610 = vmatprep.subr.mxu0 0.0
        %611 = vmatpush2.msra.mxu0 0.0
        %612 = vmatprep.subr.mxu0 0.0
        %613 = vmatpush2.msra.mxu0 0.0
        %614 = vmatprep.subr.mxu0 0.0
        %615 = vmatpush2.msra.mxu0 0.0
        %616 = vmatprep.mubr.f32.mxu0 0.0
        %617 = vmatmul.mubr.f32.gmra.mxu0 %v546
        %v618 = vpop.f32.mrf.mxu0
        %v619 = vadd.f32 0.0, %v618
        %v620 = vpop.f32.mrf.mxu0
        %v621 = vadd.f32 0.0, %v620
        %622 = vdwg.mxu0
        %v624 = vcombine.high %v507, %v507
        %v626 = vsel %vm544, %v539, 0
        %v628 = vsel %vm523, %v507, 0
        %v630 = vsel %vm523, %v624, 0
        %632 = vmatprep.subr.mxu0 0.0
        %633 = vmatpush1.msra.mxu0 0.0
        %634 = vmatprep.subr.mxu0 0.0
        %635 = vmatpush1.msra.mxu0 0.0
        %636 = vmatprep.subr.mxu0 0.0
        %637 = vmatpush1.msra.mxu0 0.0
        %638 = vmatprep.subr.mxu0 0.0
        %639 = vmatpush1.msra.mxu0 0.0
        %640 = vmatprep.subr.mxu0 0.0
        %641 = vmatpush1.msra.mxu0 0.0
        %642 = vmatprep.subr.mxu0 0.0
        %643 = vmatpush1.msra.mxu0 0.0
        %644 = vmatprep.subr.mxu0 0.0
        %645 = vmatpush1.msra.mxu0 0.0
        %646 = vmatprep.subr.mxu0 0.0
        %647 = vmatpush1.msra.mxu0 0.0
        %648 = vmatprep.subr.mxu0 0.0
        %649 = vmatpush1.msra.mxu0 0.0
        %650 = vmatprep.subr.mxu0 0.0
        %651 = vmatpush1.msra.mxu0 0.0
        %652 = vmatprep.subr.mxu0 0.0
        %653 = vmatpush1.msra.mxu0 0.0
        %654 = vmatprep.subr.mxu0 0.0
        %655 = vmatpush1.msra.mxu0 0.0
        %656 = vmatprep.subr.mxu0 0.0
        %657 = vmatpush1.msra.mxu0 0.0
        %658 = vmatprep.subr.mxu0 0.0
        %659 = vmatpush1.msra.mxu0 0.0
        %660 = vmatprep.subr.mxu0 0.0
        %661 = vmatpush1.msra.mxu0 0.0
        %662 = vmatprep.subr.mxu0 %v630
        %663 = vmatpush1.msra.mxu0 %v628
        %664 = vmatprep.subr.mxu0 0.0
        %665 = vmatpush2.msra.mxu0 0.0
        %666 = vmatprep.subr.mxu0 0.0
        %667 = vmatpush2.msra.mxu0 0.0
        %668 = vmatprep.subr.mxu0 0.0
        %669 = vmatpush2.msra.mxu0 0.0
        %670 = vmatprep.subr.mxu0 0.0
        %671 = vmatpush2.msra.mxu0 0.0
        %672 = vmatprep.subr.mxu0 0.0
        %673 = vmatpush2.msra.mxu0 0.0
        %674 = vmatprep.subr.mxu0 0.0
        %675 = vmatpush2.msra.mxu0 0.0
        %676 = vmatprep.subr.mxu0 0.0
        %677 = vmatpush2.msra.mxu0 0.0
        %678 = vmatprep.subr.mxu0 0.0
        %679 = vmatpush2.msra.mxu0 0.0
        %680 = vmatprep.subr.mxu0 0.0
        %681 = vmatpush2.msra.mxu0 0.0
        %682 = vmatprep.subr.mxu0 0.0
        %683 = vmatpush2.msra.mxu0 0.0
        %684 = vmatprep.subr.mxu0 0.0
        %685 = vmatpush2.msra.mxu0 0.0
        %686 = vmatprep.subr.mxu0 0.0
        %687 = vmatpush2.msra.mxu0 0.0
        %688 = vmatprep.subr.mxu0 0.0
        %689 = vmatpush2.msra.mxu0 0.0
        %690 = vmatprep.subr.mxu0 0.0
        %691 = vmatpush2.msra.mxu0 0.0
        %692 = vmatprep.subr.mxu0 0.0
        %693 = vmatpush2.msra.mxu0 0.0
        %694 = vmatprep.subr.mxu0 0.0
        %695 = vmatpush2.msra.mxu0 0.0
        %696 = vmatprep.mubr.f32.mxu0 0.0
        %697 = vmatmul.mubr.f32.gmra.mxu0 %v626
        %v698 = vpop.f32.mrf.mxu0
        %v699 = vadd.f32 %v619, %v698
        %v700 = vpop.f32.mrf.mxu0
        %v701 = vadd.f32 %v621, %v700
        %702 = vdwg.mxu0
        %s703 = scalar_lea.vmem %s6, 8
        %v704 = vld [vmem:[%s703] sm:$0xf]
        %v706 = vcombine.high %v513, %v513
        %v708 = vsel %vm544, %v704, 0
        %v710 = vsel %vm523, %v513, 0
        %v712 = vsel %vm523, %v706, 0
        %714 = vmatprep.subr.mxu0 0.0
        %715 = vmatpush1.msra.mxu0 0.0
        %716 = vmatprep.subr.mxu0 0.0
        %717 = vmatpush1.msra.mxu0 0.0
        %718 = vmatprep.subr.mxu0 0.0
        %719 = vmatpush1.msra.mxu0 0.0
        %720 = vmatprep.subr.mxu0 0.0
        %721 = vmatpush1.msra.mxu0 0.0
        %722 = vmatprep.subr.mxu0 0.0
        %723 = vmatpush1.msra.mxu0 0.0
        %724 = vmatprep.subr.mxu0 0.0
        %725 = vmatpush1.msra.mxu0 0.0
        %726 = vmatprep.subr.mxu0 0.0
        %727 = vmatpush1.msra.mxu0 0.0
        %728 = vmatprep.subr.mxu0 0.0
        %729 = vmatpush1.msra.mxu0 0.0
        %730 = vmatprep.subr.mxu0 0.0
        %731 = vmatpush1.msra.mxu0 0.0
        %732 = vmatprep.subr.mxu0 0.0
        %733 = vmatpush1.msra.mxu0 0.0
        %734 = vmatprep.subr.mxu0 0.0
        %735 = vmatpush1.msra.mxu0 0.0
        %736 = vmatprep.subr.mxu0 0.0
        %737 = vmatpush1.msra.mxu0 0.0
        %738 = vmatprep.subr.mxu0 0.0
        %739 = vmatpush1.msra.mxu0 0.0
        %740 = vmatprep.subr.mxu0 0.0
        %741 = vmatpush1.msra.mxu0 0.0
        %742 = vmatprep.subr.mxu0 0.0
        %743 = vmatpush1.msra.mxu0 0.0
        %744 = vmatprep.subr.mxu0 %v712
        %745 = vmatpush1.msra.mxu0 %v710
        %746 = vmatprep.subr.mxu0 0.0
        %747 = vmatpush2.msra.mxu0 0.0
        %748 = vmatprep.subr.mxu0 0.0
        %749 = vmatpush2.msra.mxu0 0.0
        %750 = vmatprep.subr.mxu0 0.0
        %751 = vmatpush2.msra.mxu0 0.0
        %752 = vmatprep.subr.mxu0 0.0
        %753 = vmatpush2.msra.mxu0 0.0
        %754 = vmatprep.subr.mxu0 0.0
        %755 = vmatpush2.msra.mxu0 0.0
        %756 = vmatprep.subr.mxu0 0.0
        %757 = vmatpush2.msra.mxu0 0.0
        %758 = vmatprep.subr.mxu0 0.0
        %759 = vmatpush2.msra.mxu0 0.0
        %760 = vmatprep.subr.mxu0 0.0
        %761 = vmatpush2.msra.mxu0 0.0
        %762 = vmatprep.subr.mxu0 0.0
        %763 = vmatpush2.msra.mxu0 0.0
        %764 = vmatprep.subr.mxu0 0.0
        %765 = vmatpush2.msra.mxu0 0.0
        %766 = vmatprep.subr.mxu0 0.0
        %767 = vmatpush2.msra.mxu0 0.0
        %768 = vmatprep.subr.mxu0 0.0
        %769 = vmatpush2.msra.mxu0 0.0
        %770 = vmatprep.subr.mxu0 0.0
        %771 = vmatpush2.msra.mxu0 0.0
        %772 = vmatprep.subr.mxu0 0.0
        %773 = vmatpush2.msra.mxu0 0.0
        %774 = vmatprep.subr.mxu0 0.0
        %775 = vmatpush2.msra.mxu0 0.0
        %776 = vmatprep.subr.mxu0 0.0
        %777 = vmatpush2.msra.mxu0 0.0
        %778 = vmatprep.mubr.f32.mxu0 0.0
        %779 = vmatmul.mubr.f32.gmra.mxu0 %v708
        %v780 = vpop.f32.mrf.mxu0
        %v781 = vadd.f32 0.0, %v780
        %v782 = vpop.f32.mrf.mxu0
        %v783 = vadd.f32 0.0, %v782
        %784 = vdwg.mxu0
        %v785 = vadd.f32 %v699, %v781
        %v786 = vadd.f32 %v701, %v783
        %v787 = vld [vmem:[%s7] sm:$0xf]
        %789 = vset.pattern.permute.xlu0 0
        %790 = vperm.xlu0 %789, %v787
        %v791 = vpop.permute.xlu0 %790
        %v793 = vadd.f32 %v785, %v791
        %v794 = vadd.f32 %v786, %v791
        %v796 = vcombine.high %v506, %v506
        %v798 = vsub.f32 %v793, %v506
        %v799 = vsub.f32 %v794, %v796
        %v800 = vmul.f32 %v798, %v798
        %v801 = vmul.f32 %v799, %v799
        %v804 = vcombine.low %v800, %v801
        %806 = vst [vmem:[%s480] sm:$0xff] %v804
        %v807 = vmul.f32 %v511, %v793
        %v808 = vmul.f32 %v511, %v794
        %v811 = vcombine.low %v807, %v808
        %v813 = vsub.f32 %v513, %v811
        %v814 = vstv %s504
        %v815 = vmul.f32 %v814, %v813
        %816 = vst [vmem:[%s487] sm:$0xff] %v815
        %s817 = sand.u32 %s223, 1
        %s818 = scalar_lea.sflag [#allocation7], %s817
        %s819 = sand.u32 %s223, 1
        %s820 = smul.addr %s819, 8
        %s821 = scalar_lea.vmem [#allocation13], %s820
        %s822 = sand.u32 %s47, 1
        %s823 = scalar_lea.sflag [#allocation15], %s822
        %s824 = sand.u32 %s251, 1
        %s825 = smul.addr %s824, 8
        %s826 = scalar_lea.vmem [#allocation14], %s825
        %s827 = sand.u32 %s47, 1
        %s828 = scalar_lea.sflag [#allocation15], %s827
        %s829 = sand.u32 %s277, 1
        %s830 = scalar_lea.vmem [#allocation16], %s829
        // Predicated region
        $region65: #{tpu_custom_call.1} parent=43 // pred_check
          %p831 = pneg %p233
        $region66: #{tpu_custom_call.1} parent=43 // pred_check_branch
          %833 = sbr.rel (%p831) target = $region68
        $region67: #{tpu_custom_call.1} parent=43 // pred_region
          %s834 = smul.u32 2, %s52
          %s836 = ssub.s32 128, 128
          %837 = vsyncadd %s818, %s836
          %s838 = smul.addr %s51, 2
          %s839 = sadd.s32 %s834, %s838
          %s840 = smul.addr %s839, 64
          %s841 = scalar_lea.hbm %s8, %s840
          %s843 = sshll.u32 %s821, 4
          %s844 = int_to_ptr.vmem [resolvable:$true] %s843
          %846 = dma.vmem_to_hbm [thread:$0]  %s844, 128, %s841, %s818
        $region68: #{tpu_custom_call.1} parent=43 // pred_fallthru
          _
        // Predicated region
        $region69: #{tpu_custom_call.1} parent=43 // pred_check
          %p847 = pneg %p261
        $region70: #{tpu_custom_call.1} parent=43 // pred_check_branch
          %849 = sbr.rel (%p847) target = $region72
        $region71: #{tpu_custom_call.1} parent=43 // pred_region
          %s850 = smul.u32 2, %s52
          %s852 = ssub.s32 128, 128
          %853 = vsyncadd %s823, %s852
          %s854 = smul.addr %s51, 2
          %s855 = sadd.s32 %s850, %s854
          %s856 = smul.addr %s855, 64
          %s857 = scalar_lea.hbm %s9, %s856
          %s859 = sshll.u32 %s826, 4
          %s860 = int_to_ptr.vmem [resolvable:$true] %s859
          %862 = dma.vmem_to_hbm [thread:$0]  %s860, 128, %s857, %s823
        $region72: #{tpu_custom_call.1} parent=43 // pred_fallthru
          _
        // Predicated region
        $region73: #{tpu_custom_call.1} parent=43 // pred_check
          %p863 = pneg %p287
        $region74: #{tpu_custom_call.1} parent=43 // pred_check_branch
          %865 = sbr.rel (%p863) target = $region76
        $region75: #{tpu_custom_call.1} parent=43 // pred_region
          %s867 = ssub.s32 16, 16
          %868 = vsyncadd %s828, %s867
          %s869 = smul.addr %s51, 16
          %s870 = scalar_lea.hbm %s10, %s869
          %s872 = sshll.u32 %s830, 4
          %s873 = int_to_ptr.vmem [resolvable:$true] %s872
          %875 = dma.vmem_to_hbm [thread:$0]  %s873, 16, %s870, %s828
        $region76: #{tpu_custom_call.1} parent=43 // pred_fallthru
          _
      $region44: #{tpu_custom_call.1} parent=5 // pred_fallthru
        _
      %p876 = scmp.le.s32.totalorder 2, %s42
      // Predicated region
      $region77: #{tpu_custom_call.1} parent=5 // pred_check
        %p877 = pneg %p876
      $region78: #{tpu_custom_call.1} parent=5 // pred_check_branch
        %879 = sbr.rel (%p877) target = $region80
      $region79: #{tpu_custom_call.1} parent=5 // pred_region
        %s880 = ssub.s32 %s42, 2
        // Predicated region
        $region81: #{tpu_custom_call.1} parent=79 // pred_check
          %p881 = pneg %p239
        $region82: #{tpu_custom_call.1} parent=79 // pred_check_branch
          %883 = sbr.rel (%p881) target = $region84
        $region83: #{tpu_custom_call.1} parent=79 // pred_region
          %s884 = sand.u32 %s224, 1
          %s885 = scalar_lea.sflag [#allocation7], %s884
          %s886 = sand.u32 %s224, 1
          %s887 = smul.addr %s886, 8
          %s888 = scalar_lea.vmem [#allocation13], %s887
          %889 = dma.done %s885, 128
        $region84: #{tpu_custom_call.1} parent=79 // pred_fallthru
          _
        // Predicated region
        $region85: #{tpu_custom_call.1} parent=79 // pred_check
          %p890 = pneg %p267
        $region86: #{tpu_custom_call.1} parent=79 // pred_check_branch
          %892 = sbr.rel (%p890) target = $region88
        $region87: #{tpu_custom_call.1} parent=79 // pred_region
          %s893 = sand.u32 %s48, 1
          %s894 = scalar_lea.sflag [#allocation15], %s893
          %s895 = sand.u32 %s252, 1
          %s896 = smul.addr %s895, 8
          %s897 = scalar_lea.vmem [#allocation14], %s896
          %898 = dma.done %s894, 128
        $region88: #{tpu_custom_call.1} parent=79 // pred_fallthru
          _
        // Predicated region
        $region89: #{tpu_custom_call.1} parent=79 // pred_check
          %p899 = pneg %p293
        $region90: #{tpu_custom_call.1} parent=79 // pred_check_branch
          %901 = sbr.rel (%p899) target = $region92
        $region91: #{tpu_custom_call.1} parent=79 // pred_region
          %s902 = sand.u32 %s48, 1
          %s903 = scalar_lea.sflag [#allocation15], %s902
          %s904 = sand.u32 %s278, 1
          %s905 = scalar_lea.vmem [#allocation16], %s904
          %906 = dma.done %s903, 16
        $region92: #{tpu_custom_call.1} parent=79 // pred_fallthru
          _
      $region80: #{tpu_custom_call.1} parent=5 // pred_fallthru
        _
    $region6: #{tpu_custom_call.1} parent=1 // loop_footer
      %s46 = sadd.s32 1, %s42
    $region7: #{tpu_custom_call.1} parent=1 // loop_footer_branch
      %41 = sbr.rel target = $region3
    $region8: #{tpu_custom_call.1} parent=1 // loop_exit
      _
    %907 = vsyncpa [#allocation6], 1
    %s908 = scalar_lea.sflag [#allocation6], 1
    %909 = vsyncpa %s908, 1
    %910 = vsyncpa [#allocation9], 1
    %s911 = scalar_lea.sflag [#allocation9], 1
    %912 = vsyncpa %s911, 1
    %913 = vsyncpa [#allocation12], 1
    %s914 = scalar_lea.sflag [#allocation12], 1
    %915 = vsyncpa %s914, 1
    %916 = vsyncpa [#allocation7], 1
    %s917 = scalar_lea.sflag [#allocation7], 1
    %918 = vsyncpa %s917, 1
    %919 = vsyncpa [#allocation15], 1
    %s920 = scalar_lea.sflag [#allocation15], 1
    %921 = vsyncpa %s920, 1

</llo_original>
